<compile_context>
chip_gen: v5e
topology: v5e:2x2
jax: 0.10.0
libtpu: 0.0.40
codegen_flags: <defaults>
</compile_context>

<pallas_src>
import jax
import jax.numpy as jnp
from jax.experimental import pallas as pl
from jax.experimental.pallas import tpu as pltpu


def _round_up(x, m):
    return ((x + m - 1) // m) * m


def _vmem_budget_and_limit():
    """Per-generation VMEM sizing: large tiles on v5e/v6e (128 MiB VMEM),
    ~48 MiB cap on v7x (64 MiB / TensorCore). Conservative fallback if the
    hardware query is unavailable."""
    try:
        cap = int(pltpu.get_tpu_info().vmem_capacity_bytes)
    except Exception:
        cap = 64 * 1024 * 1024  # v7x-safe fallback
    limit = min(cap * 3 // 4, cap - 8 * 1024 * 1024)
    limit = max(limit, 32 * 1024 * 1024)
    budget = limit - 4 * 1024 * 1024
    return budget, limit


def _linear_cls_head_kernel(x_ref, w_ref, b_ref, o_ref):
    # x_ref: [tb, C]   streamed batch tile
    # w_ref: [C, N']   resident, pre-transposed weight (DMA'd once)
    # b_ref: [1, N']   resident bias
    # o_ref: [tb, N']  output tile (lane-dense when N' is a multiple of 128)
    acc = jnp.dot(x_ref[...], w_ref[...], preferred_element_type=jnp.float32)
    o_ref[...] = (acc + b_ref[...].astype(jnp.float32)).astype(o_ref.dtype)


def prepare_linear_cls_head_params(weight, bias, *, pad_classes=True):
    """One-time parameter prep (hoisted out of the per-call forward path).

    Args:
      weight: [num_classes, in_channels]  (PyTorch nn.Linear layout)
      bias:   [num_classes]
      pad_classes: pad num_classes up to a multiple of 128 (lane-dense output
        stores; best for large-batch). Use False for tiny-batch inference so
        the per-call weight DMA is not inflated 16x by zero padding.
    Returns:
      (w_prep [in_channels, N'], b_prep [1, N'])
    """
    n, c = weight.shape
    assert bias.shape == (n,)
    w_t = weight.T                                  # one-time transpose -> [C, N]
    n_out = _round_up(n, 128) if pad_classes else n
    if n_out != n:
        w_t = jnp.pad(w_t, ((0, 0), (0, n_out - n)))
        bias = jnp.pad(bias, (0, n_out - n))
    return w_t, bias.reshape(1, n_out)


def linear_cls_head_forward(x, w_prep, b_prep, *, num_classes=None, block_b=1024):
    """y = x @ W.T + b using params from prepare_linear_cls_head_params.

    Args:
      x: [B, in_channels]
      w_prep, b_prep: prepped params ([C, N'], [1, N'])
      num_classes: if given (and < N'), slice the padded logits back to
        [B, num_classes]; pass None to return the padded logits and avoid the
        extra copy (padded columns are exact zeros).
      block_b: max batch-tile size (rows per grid step).
    Returns:
      [B, num_classes] (or [B, N'] when num_classes is None).
    """
    B, C = x.shape
    Cw, n_out = w_prep.shape
    assert Cw == C and b_prep.shape == (1, n_out)

    dbytes = jnp.dtype(x.dtype).itemsize
    sub = max(8, 32 // dbytes)           # sublane packing (8 f32 / 16 bf16)
    vmem_budget, vmem_limit = _vmem_budget_and_limit()

    # Batch tile: as large as fits the VMEM budget (double-buffered x/out
    # tiles + resident weight/bias), but keep >= 2 grid steps when B allows it
    # so v7x megacore can split the batch across both TensorCores.
    tb = min(int(block_b), B)
    if tb < B:
        tb = _round_up(tb, sub)
    fixed = 2 * (n_out * C + n_out) * dbytes
    while tb > sub and fixed + 2 * tb * (C + n_out) * dbytes > vmem_budget:
        tb = max(sub, _round_up(tb // 2, sub))
    if tb >= B and B > 2 * sub:
        tb = _round_up(pl.cdiv(B, 2), sub)
    if tb >= B:
        tb = B                           # single full-extent block

    grid = (pl.cdiv(B, tb),)             # ragged last block: Pallas masks the
                                         # out-of-bounds output rows; no x pad.

    cost = pl.CostEstimate(
        flops=2 * B * C * n_out,
        transcendentals=0,
        bytes_accessed=(B * C + C * n_out + n_out + B * n_out) * dbytes,
    )

    # NOTE: weight/bias have constant index_maps so they are DMA'd only once;
    # single-buffering them (pipeline_mode=pl.Buffered(1)) would only reclaim
    # <1 MiB of VMEM here, so they are left on the default buffering.
    out = pl.pallas_call(
        _linear_cls_head_kernel,
        out_shape=jax.ShapeDtypeStruct((B, n_out), x.dtype),
        grid_spec=pl.GridSpec(
            grid=grid,
            in_specs=[
                pl.BlockSpec((tb, C), lambda i: (i, 0)),       # streamed x
                pl.BlockSpec((C, n_out), lambda i: (0, 0)),    # resident W^T
                pl.BlockSpec((1, n_out), lambda i: (0, 0)),    # resident bias
            ],
            out_specs=pl.BlockSpec((tb, n_out), lambda i: (i, 0)),
        ),
        compiler_params=pltpu.CompilerParams(
            dimension_semantics=("parallel",),
            vmem_limit_bytes=vmem_limit,
        ),
        cost_estimate=cost,
    )(x, w_prep, b_prep)

    if num_classes is not None and num_classes != n_out:
        out = out[:, :num_classes]       # optional; pass num_classes=None to skip
    return out


if __name__ == "__main__":
    # Small shapes consistent with LinearClsHead(num_classes, in_channels).
    batch = 2
    in_channels = 32
    num_classes = 8

    key = jax.random.PRNGKey(0)
    kx, kw, kb, kx2 = jax.random.split(key, 4)

    # Deterministic synthetic parameters (mimics nn.Linear uniform init).
    bound = 1.0 / jnp.sqrt(in_channels)
    weight = jax.random.uniform(
        kw, (num_classes, in_channels), jnp.float32, -bound, bound)
    bias = jax.random.uniform(
        kb, (num_classes,), jnp.float32, -bound, bound)
    x = jax.random.normal(kx, (batch, in_channels), jnp.float32)
    y_ref = x @ weight.T + bias

    # Lane-dense (padded-classes) path; params prepped once, sliced output.
    w_prep, b_prep = prepare_linear_cls_head_params(weight, bias, pad_classes=True)
    y = jax.block_until_ready(
        linear_cls_head_forward(x, w_prep, b_prep, num_classes=num_classes))
    assert y.shape == (batch, num_classes)
    assert jnp.allclose(y, y_ref, atol=1e-5, rtol=1e-5)

    # Multi-tile, ragged batch (B=20 not divisible by tile=8; no x padding).
    x2 = jax.random.normal(kx2, (20, in_channels), jnp.float32)
    y2 = jax.block_until_ready(
        linear_cls_head_forward(x2, w_prep, b_prep,
                                num_classes=num_classes, block_b=8))
    assert jnp.allclose(y2, x2 @ weight.T + bias, atol=1e-5, rtol=1e-5)

    # Tiny-batch inference path: unpadded classes (no 16x weight DMA inflation,
    # no output slice needed).
    w_small, b_small = prepare_linear_cls_head_params(
        weight, bias, pad_classes=False)
    y3 = jax.block_until_ready(linear_cls_head_forward(x, w_small, b_small))
    assert y3.shape == (batch, num_classes)
    assert jnp.allclose(y3, y_ref, atol=1e-5, rtol=1e-5)

    print("KERNEL_OK")
</pallas_src>

<mosaic_0001>
module attributes {stable_mosaic.version = 11 : i64} {
  func.func @_linear_cls_head_kernel(%arg0: i32, %arg1: memref<2x32xf32, #tpu.memory_space<vmem>>, %arg2: memref<32x128xf32, #tpu.memory_space<vmem>>, %arg3: memref<1x128xf32, #tpu.memory_space<vmem>>, %arg4: memref<2x128xf32, #tpu.memory_space<vmem>>) attributes {dimension_semantics = [#tpu.dimension_semantics<parallel>], iteration_bounds = array<i64: 1>, scalar_prefetch = 0 : i64, scratch_operands = 0 : i64, tpu.core_type = #tpu.core_type<tc>, window_params = [{transform_indices = @transform_0, window_bounds = array<i64: 2, 32>}, {pipeline_mode = #tpu.pipeline_mode<synchronous>, transform_indices = @transform_1, window_bounds = array<i64: 32, 128>}, {pipeline_mode = #tpu.pipeline_mode<synchronous>, transform_indices = @transform_2, window_bounds = array<i64: 1, 128>}, {transform_indices = @transform_3, window_bounds = array<i64: 2, 128>}]} {
    %c0 = arith.constant 0 : index
    %c0_0 = arith.constant 0 : index
    %0 = vector.load %arg1[%c0, %c0_0] : memref<2x32xf32, #tpu.memory_space<vmem>>, vector<2x32xf32>
    %c0_1 = arith.constant 0 : index
    %c0_2 = arith.constant 0 : index
    %1 = vector.load %arg2[%c0_1, %c0_2] : memref<32x128xf32, #tpu.memory_space<vmem>>, vector<32x128xf32>
    %cst = arith.constant dense<0.000000e+00> : vector<2x128xf32>
    %2 = tpu.matmul %0, %1, %cst {dimension_numbers = #tpu.dot_dimension_numbers<[1], [0], [0], [1], [0, 0, 1, 1], [], []>} : vector<2x32xf32>, vector<32x128xf32>, vector<2x128xf32> -> vector<2x128xf32>
    %c0_3 = arith.constant 0 : index
    %c0_4 = arith.constant 0 : index
    %3 = vector.load %arg3[%c0_3, %c0_4] : memref<1x128xf32, #tpu.memory_space<vmem>>, vector<1x128xf32>
    %4 = vector.broadcast %3 : vector<1x128xf32> to vector<2x128xf32>
    %5 = arith.addf %2, %4 : vector<2x128xf32>
    %c0_5 = arith.constant 0 : index
    %c0_6 = arith.constant 0 : index
    %6 = vector.load %arg4[%c0_5, %c0_6] : memref<2x128xf32, #tpu.memory_space<vmem>>, vector<2x128xf32>
    tpu.vector_store %arg4[%c0_5, %c0_6], %5 {strides = array<i32>} : memref<2x128xf32, #tpu.memory_space<vmem>>, vector<2x128xf32>,
    return
  }
  func.func @transform_0(%arg0: i32) -> (i32, i32) {
    %c0_i32 = arith.constant 0 : i32
    %c0_i32_0 = arith.constant 0 : i32
    return %arg0, %c0_i32 : i32, i32
  }
  func.func @transform_1(%arg0: i32) -> (i32, i32) {
    %c0_i32 = arith.constant 0 : i32
    %c0_i32_0 = arith.constant 0 : i32
    %c0_i32_1 = arith.constant 0 : i32
    return %c0_i32, %c0_i32_0 : i32, i32
  }
  func.func @transform_2(%arg0: i32) -> (i32, i32) {
    %c0_i32 = arith.constant 0 : i32
    %c0_i32_0 = arith.constant 0 : i32
    %c0_i32_1 = arith.constant 0 : i32
    return %c0_i32, %c0_i32_0 : i32, i32
  }
  func.func @transform_3(%arg0: i32) -> (i32, i32) {
    %c0_i32 = arith.constant 0 : i32
    %c0_i32_0 = arith.constant 0 : i32
    return %arg0, %c0_i32 : i32, i32
  }
}

</mosaic_0001>

<llo_original>
// kernel: tpu_custom_call.1
$region0: #{tpu_custom_call.1}
  #allocation0 [shape = 'u32[]', space=smem, size = 0x4, offset = 0x4, fixed_abs, tag = 'smem constant byte address 0x4 - core index']
  #allocation1 [shape = 'u32[72,128]{1,0:T(1,128)}', space=vmem, size = 0x9000, scoped, tag = 'internal scratch']
  %s0 = inlined_call_operand.hbm [shape: f32[2,32], index: 0, kind: input, shape index: {}]
  %s1 = inlined_call_operand.hbm [shape: f32[32,128], index: 1, kind: input, shape index: {}]
  %s2 = inlined_call_operand.vmem [shape: f32[1,128], index: 2, kind: input, shape index: {}]
  %s3 = inlined_call_operand.hbm [shape: f32[2,128], index: 3, kind: output, shape index: {}]
  %s4 = sld [smem:[#allocation0]]
  $region30: #{tpu_custom_call.1} parent=0
    _
  %s6 = ssub.s32 1, %s4
  %s7 = scalar_select 0, %s6, %s4
  $region1: #{tpu_custom_call.1} parent=0
    #allocation2 [shape = 'u8[1024]{0}', space=vmem, size = 0x400, scoped, tag = 'input window, operand 0, single buffered']
    #allocation3 [shape = 's32[1]{0}', space=sflag, size = 0x4, scoped, tag = 'scoped memory for tpu_custom_call.1']
    #allocation4 [shape = 's32[1]{0}', space=sflag, size = 0x4, scoped, tag = 'scoped memory for tpu_custom_call.1']
    #allocation5 [shape = 'u8[16384]{0}', space=vmem, size = 0x4000, scoped, tag = 'input window, operand 1, single buffered']
    #allocation6 [shape = 's32[1]{0}', space=sflag, size = 0x4, scoped, tag = 'scoped memory for tpu_custom_call.1']
    #allocation7 [shape = 'u8[1024]{0}', space=vmem, size = 0x400, scoped, tag = 'output window, operand 0, single buffered']
    %8 = vsyncpa [#allocation3], 0
    %9 = vsyncpa [#allocation6], 0
    %10 = vsyncpa [#allocation4], 0
    // Predicated region
    $region2: #{tpu_custom_call.1} parent=1 // pred_check
      _
    $region3: #{tpu_custom_call.1} parent=1 // pred_check_branch
      %12 = sbr.rel (0) target = $region5
    $region4: #{tpu_custom_call.1} parent=1 // pred_region
      %14 = vsyncadd [#allocation3], 0
      %s16 = sshll.u32 %s0, 4
      %s17 = int_to_ptr.hbm [resolvable:$true] %s16
      %s18 = sshll.u32 [#allocation2], 4
      %s19 = int_to_ptr.vmem [resolvable:$true] %s18
      %21 = dma.hbm_to_vmem [thread:$0]  %s17, 32, %s19, [#allocation3]
    $region5: #{tpu_custom_call.1} parent=1 // pred_fallthru
      _
    // Predicated region
    $region6: #{tpu_custom_call.1} parent=1 // pred_check
      _
    $region7: #{tpu_custom_call.1} parent=1 // pred_check_branch
      %23 = sbr.rel (0) target = $region9
    $region8: #{tpu_custom_call.1} parent=1 // pred_region
      %25 = vsyncadd [#allocation6], 0
      %s26 = sshll.u32 %s1, 4
      %s27 = int_to_ptr.hbm [resolvable:$true] %s26
      %s28 = sshll.u32 [#allocation5], 4
      %s29 = int_to_ptr.vmem [resolvable:$true] %s28
      %34 = dma.hbm_to_vmem [thread:$0]  %s27, 512, %s29, [#allocation6], 128, 128, 8
    $region9: #{tpu_custom_call.1} parent=1 // pred_fallthru
      _
    // Predicated region
    $region10: #{tpu_custom_call.1} parent=1 // pred_check
      _
    $region11: #{tpu_custom_call.1} parent=1 // pred_check_branch
      %36 = sbr.rel (0) target = $region13
    $region12: #{tpu_custom_call.1} parent=1 // pred_region
      _
    $region13: #{tpu_custom_call.1} parent=1 // pred_fallthru
      _
    // Predicated region
    $region14: #{tpu_custom_call.1} parent=1 // pred_check
      _
    $region15: #{tpu_custom_call.1} parent=1 // pred_check_branch
      %38 = sbr.rel (0) target = $region17
    $region16: #{tpu_custom_call.1} parent=1 // pred_region
      %40 = dma.done [#allocation3], 32
    $region17: #{tpu_custom_call.1} parent=1 // pred_fallthru
      _
    // Predicated region
    $region18: #{tpu_custom_call.1} parent=1 // pred_check
      _
    $region19: #{tpu_custom_call.1} parent=1 // pred_check_branch
      %42 = sbr.rel (0) target = $region21
    $region20: #{tpu_custom_call.1} parent=1 // pred_region
      %44 = dma.done [#allocation6], 512
    $region21: #{tpu_custom_call.1} parent=1 // pred_fallthru
      _
    %v45 = vld [vmem:[#allocation2] sm:$0x3]
    %v46 = vld [vmem:[#allocation5] sm:$0xff]
    %v47 = vld [vmem:[#allocation5 + $0x8] sm:$0xff]
    %v48 = vld [vmem:[#allocation5 + $0x10] sm:$0xff]
    %v49 = vld [vmem:[#allocation5 + $0x18] sm:$0xff]
    %v50 = vld [vmem:[%s2] sm:$0x1]
    %v52 = vperm.slane %v50, 0
    %vm54 = vcmask 261120
    %v56 = vsel %vm54, %v45, 0
    %58 = vmatpush.msra.mxu0 0.0
    %59 = vmatpush.msra.mxu0 0.0
    %60 = vmatpush.msra.mxu0 0.0
    %61 = vmatpush.msra.mxu0 0.0
    %62 = vmatpush.msra.mxu0 0.0
    %63 = vmatpush.msra.mxu0 0.0
    %64 = vmatpush.msra.mxu0 0.0
    %65 = vmatpush.msra.mxu0 0.0
    %66 = vmatpush.msra.mxu0 0.0
    %67 = vmatpush.msra.mxu0 0.0
    %68 = vmatpush.msra.mxu0 0.0
    %69 = vmatpush.msra.mxu0 0.0
    %70 = vmatpush.msra.mxu0 %v49
    %71 = vmatpush.msra.mxu0 %v48
    %72 = vmatpush.msra.mxu0 %v47
    %73 = vmatpush.msra.mxu0 %v46
    %74 = vmatmul.f32.gmra.mxu0 %v56
    %v75 = vpop.f32.mrf.mxu0
    %v76 = vadd.f32 %v52, %v75
    %77 = vdwg.mxu0
    %78 = vst [vmem:[#allocation7] sm:$0x3] %v76
    // Predicated region
    $region22: #{tpu_custom_call.1} parent=1 // pred_check
      _
    $region23: #{tpu_custom_call.1} parent=1 // pred_check_branch
      %80 = sbr.rel (0) target = $region25
    $region24: #{tpu_custom_call.1} parent=1 // pred_region
      %82 = vsyncadd [#allocation4], 0
      %s84 = sshll.u32 [#allocation7], 4
      %s85 = int_to_ptr.vmem [resolvable:$true] %s84
      %s86 = sshll.u32 %s3, 4
      %s87 = int_to_ptr.hbm [resolvable:$true] %s86
      %89 = dma.vmem_to_hbm [thread:$0]  %s85, 32, %s87, [#allocation4]
    $region25: #{tpu_custom_call.1} parent=1 // pred_fallthru
      _
    // Predicated region
    $region26: #{tpu_custom_call.1} parent=1 // pred_check
      _
    $region27: #{tpu_custom_call.1} parent=1 // pred_check_branch
      %91 = sbr.rel (0) target = $region29
    $region28: #{tpu_custom_call.1} parent=1 // pred_region
      %93 = dma.done [#allocation4], 32
    $region29: #{tpu_custom_call.1} parent=1 // pred_fallthru
      _
    %94 = vsyncpa [#allocation3], 1
    %95 = vsyncpa [#allocation6], 1
    %96 = vsyncpa [#allocation4], 1

</llo_original>
